<compile_context>
chip_gen: v6e
topology: v6e:2x2x1
jax: 0.10.0
libtpu: 0.0.40
codegen_flags: <defaults>
</compile_context>

<pallas_src>
import functools

import jax
import jax.numpy as jnp
from jax.experimental import pallas as pl
from jax.experimental.pallas import tpu as pltpu


_LANES = 128                        # vreg lane width
_VMEM_BLOCK_BUDGET = 6 * 1024 * 1024  # double-buffered pipeline footprint target
                                      # (safe under v5e's 16 MiB scoped-VMEM default)


def _round_up(x: int, m: int) -> int:
    return ((x + m - 1) // m) * m


def _pick_block_rows(rows: int, width: int, bytes_per_elem: int) -> int:
    """Largest block that (a) fits the double-buffered VMEM budget and
    (b) leaves >= 2 grid blocks so v7x's two TensorCores both get work."""
    cap = _VMEM_BLOCK_BUDGET // (2 * bytes_per_elem * width)
    cap = max(8, (cap // 8) * 8)
    if rows < 16:
        # Too small to split usefully; one full-extent block (valid BlockSpec:
        # block dim equals the full array dim).
        return rows
    half = _round_up((rows + 1) // 2, 8)
    return min(cap, half)


# ----------------------------------------------------------------------------
# Pallas kernel: masked label assignment
#   out = where(decoder_attention_mask == pad_token_id, -100, labels_input_ids)
# ----------------------------------------------------------------------------
def _mask_labels_kernel(labels_ref, dmask_ref, out_ref, *, pad_token_id):
    # Compare the mask in its native (packed) dtype; no widening pass.
    is_pad = dmask_ref[...] == jnp.asarray(pad_token_id, dtype=dmask_ref.dtype)
    out_ref[...] = jnp.where(is_pad,
                             jnp.asarray(-100, dtype=out_ref.dtype),
                             labels_ref[...])


@functools.partial(jax.jit, static_argnums=2, donate_argnums=(0,))
def mask_labels(labels_input_ids, decoder_attention_mask, pad_token_id):
    """Exact reproduction of:
         labels = labels_input_ids.clone()
         labels[decoder_attention_mask == pad_token_id] = -100

    NOTE: as in the PyTorch original, this only masks padded positions when
    pad_token_id == 0 (attention-mask values are 0/1); T5's pad id is 0.
    The labels buffer is donated so the pallas output aliases it in place.
    """
    assert labels_input_ids.shape == decoder_attention_mask.shape
    B, S = labels_input_ids.shape
    n = B * S

    labels = labels_input_ids.astype(jnp.int32)
    dmask = decoder_attention_mask  # keep native dtype (no extra HBM pass)

    if n % _LANES == 0:
        # Lane-dense layout (pure metadata reshape, no copy / no padding):
        # full, unmasked vst stores.
        rows, width = n // _LANES, _LANES
        labels2d = labels.reshape(rows, width)
        mask2d = dmask.reshape(rows, width)
    else:
        # Small / irregular shapes: tile the original array directly; the lane
        # dim equals the full second dim so the BlockSpec stays legal.
        rows, width = B, S
        labels2d = labels
        mask2d = dmask

    mask_bytes = jnp.dtype(mask2d.dtype).itemsize
    bytes_per_elem = 4 + mask_bytes + 4          # labels in + mask in + out
    block_rows = _pick_block_rows(rows, width, bytes_per_elem)
    grid = (pl.cdiv(rows, block_rows),)           # Pallas handles boundary blocks

    kernel = functools.partial(_mask_labels_kernel,
                               pad_token_id=int(pad_token_id))

    out2d = pl.pallas_call(
        kernel,
        out_shape=jax.ShapeDtypeStruct((rows, width), jnp.int32),
        grid=grid,
        in_specs=[
            pl.BlockSpec((block_rows, width), lambda i: (i, 0)),
            pl.BlockSpec((block_rows, width), lambda i: (i, 0)),
        ],
        out_specs=pl.BlockSpec((block_rows, width), lambda i: (i, 0)),
        input_output_aliases={0: 0},  # output reuses the (donated) labels buffer
        compiler_params=pltpu.CompilerParams(
            dimension_semantics=("parallel",),
        ),
        cost_estimate=pl.CostEstimate(
            flops=n, transcendentals=0, bytes_accessed=n * bytes_per_elem),
    )(labels2d, mask2d)

    return out2d.reshape(B, S)


# ----------------------------------------------------------------------------
# JAX-side analogue of T5_Encode_Feature
# ----------------------------------------------------------------------------
class T5EncodeFeature:
    """Mirrors T5_Encode_Feature.forward semantics on synthetic tokenizations."""

    def __init__(self, config):
        self.padding = config["tokenizer"]["padding"]
        self.max_input_length = config["tokenizer"]["max_input_length"]
        self.max_target_length = config["tokenizer"]["max_target_length"]
        self.truncation = config["tokenizer"]["truncation"]
        self.pad_token_id = 0          # T5 tokenizer pad_token_id
        self.vocab_size = 32000        # T5 vocab size (synthetic)

    # TODO(synk): real subword tokenization (string -> ids) has no Pallas
    # equivalent; synthesize deterministic token ids / masks instead.
    def _fake_tokenize(self, key, batch, max_len):
        k_ids, k_len = jax.random.split(key)
        ids = jax.random.randint(
            k_ids, (batch, max_len), 1, self.vocab_size, dtype=jnp.int32
        )
        lengths = jax.random.randint(
            k_len, (batch,), max_len // 2, max_len + 1, dtype=jnp.int32
        )
        positions = jnp.arange(max_len, dtype=jnp.int32)[None, :]
        attention_mask = (positions < lengths[:, None]).astype(jnp.int32)
        input_ids = jnp.where(attention_mask == 1, ids,
                              jnp.int32(self.pad_token_id))
        return input_ids, attention_mask

    def forward(self, key, batch, with_answers=True):
        k_in, k_ans = jax.random.split(key)
        input_ids, attention_mask = self._fake_tokenize(
            k_in, batch, self.max_input_length
        )
        encodings = {"input_ids": input_ids, "attention_mask": attention_mask}

        if with_answers:
            tgt_ids, decoder_attention_mask = self._fake_tokenize(
                k_ans, batch, self.max_target_length
            )
            # Hot path -> Pallas kernel (elementwise masked select on TPU VPU).
            # tgt_ids is donated (consumed) by mask_labels, matching the
            # PyTorch `.clone()` + in-place masking semantics.
            labels = mask_labels(
                tgt_ids, decoder_attention_mask, self.pad_token_id
            )
            encodings.update(
                {"labels": labels,
                 "decoder_attention_mask": decoder_attention_mask}
            )
        return encodings


# ----------------------------------------------------------------------------
if __name__ == "__main__":
    config = {
        "text_embedding": {"text_encoder": "t5-base"},
        "tokenizer": {
            "padding": "max_length",
            "max_input_length": 16,
            "max_target_length": 8,
            "truncation": True,
        },
        "train": {"cuda_device": "cuda:0"},
    }

    model = T5EncodeFeature(config)
    key = jax.random.PRNGKey(0)
    batch = 2

    encodings = model.forward(key, batch, with_answers=True)
    jax.block_until_ready(encodings)

    # Reference check in plain JAX (same semantics as the PyTorch indexing op).
    # Re-tokenize with the same key -> fresh (non-donated) arrays.
    _, k_ans = jax.random.split(key)
    tgt_ids, tgt_mask = model._fake_tokenize(k_ans, batch,
                                             model.max_target_length)
    ref_labels = jnp.where(tgt_mask == model.pad_token_id,
                           jnp.int32(-100), tgt_ids)

    assert encodings["labels"].shape == (batch,
                                         config["tokenizer"]["max_target_length"])
    assert encodings["labels"].dtype == jnp.int32
    assert bool(jnp.all(encodings["labels"] == ref_labels))
    assert bool(jnp.all(encodings["decoder_attention_mask"] == tgt_mask))

    # Also exercise the lane-dense fast path (B*S % 128 == 0).
    k_ids2, k_len2 = jax.random.split(jax.random.PRNGKey(1))
    ids2 = jax.random.randint(k_ids2, (4, 128), 1, model.vocab_size,
                              dtype=jnp.int32)
    lens2 = jax.random.randint(k_len2, (4,), 1, 129, dtype=jnp.int32)
    mask2 = (jnp.arange(128, dtype=jnp.int32)[None, :]
             < lens2[:, None]).astype(jnp.int32)
    ref2 = jnp.where(mask2 == model.pad_token_id, jnp.int32(-100), ids2)
    out2 = mask_labels(ids2, mask2, model.pad_token_id)   # ids2 donated here
    jax.block_until_ready(out2)
    assert bool(jnp.all(out2 == ref2))

    print("KERNEL_OK")
</pallas_src>

<mosaic_0001>
module attributes {stable_mosaic.version = 11 : i64} {
  func.func @_mask_labels_kernel(%arg0: i32, %arg1: memref<2x8xi32, #tpu.memory_space<vmem>>, %arg2: memref<2x8xi32, #tpu.memory_space<vmem>>, %arg3: memref<2x8xi32, #tpu.memory_space<vmem>>) attributes {dimension_semantics = [#tpu.dimension_semantics<parallel>], iteration_bounds = array<i64: 1>, scalar_prefetch = 0 : i64, scratch_operands = 0 : i64, tpu.core_type = #tpu.core_type<tc>, window_params = [{transform_indices = @transform_0, window_bounds = array<i64: 2, 8>}, {transform_indices = @transform_1, window_bounds = array<i64: 2, 8>}, {transform_indices = @transform_2, window_bounds = array<i64: 2, 8>}]} {
    %c0 = arith.constant 0 : index
    %c0_0 = arith.constant 0 : index
    %0 = vector.load %arg2[%c0, %c0_0] : memref<2x8xi32, #tpu.memory_space<vmem>>, vector<2x8xi32>
    %c0_i32 = arith.constant 0 : i32
    %1 = vector.broadcast %c0_i32 : i32 to vector<2x8xi32>
    %2 = arith.cmpi eq, %0, %1 : vector<2x8xi32>
    %c0_1 = arith.constant 0 : index
    %c0_2 = arith.constant 0 : index
    %3 = vector.load %arg1[%c0_1, %c0_2] : memref<2x8xi32, #tpu.memory_space<vmem>>, vector<2x8xi32>
    %c-100_i32 = arith.constant -100 : i32
    %4 = vector.broadcast %c-100_i32 : i32 to vector<2x8xi32>
    %5 = arith.select %2, %4, %3 : vector<2x8xi1>, vector<2x8xi32>
    %c0_3 = arith.constant 0 : index
    %c0_4 = arith.constant 0 : index
    %6 = vector.load %arg3[%c0_3, %c0_4] : memref<2x8xi32, #tpu.memory_space<vmem>>, vector<2x8xi32>
    tpu.vector_store %arg3[%c0_3, %c0_4], %5 {strides = array<i32>} : memref<2x8xi32, #tpu.memory_space<vmem>>, vector<2x8xi32>,
    return
  }
  func.func @transform_0(%arg0: i32) -> (i32, i32) {
    %c0_i32 = arith.constant 0 : i32
    %c0_i32_0 = arith.constant 0 : i32
    return %arg0, %c0_i32 : i32, i32
  }
  func.func @transform_1(%arg0: i32) -> (i32, i32) {
    %c0_i32 = arith.constant 0 : i32
    %c0_i32_0 = arith.constant 0 : i32
    return %arg0, %c0_i32 : i32, i32
  }
  func.func @transform_2(%arg0: i32) -> (i32, i32) {
    %c0_i32 = arith.constant 0 : i32
    %c0_i32_0 = arith.constant 0 : i32
    return %arg0, %c0_i32 : i32, i32
  }
}

</mosaic_0001>

<llo_original>
// kernel: mask_labels.1
$region0: #{mask_labels.1}
  #allocation0 [shape = 'u32[]', space=smem, size = 0x4, offset = 0x4, fixed_abs, tag = 'smem constant byte address 0x4 - core index']
  #allocation1 [shape = 'u32[144,128]{1,0:T(1,128)}', space=vmem, size = 0x12000, scoped, tag = 'internal scratch']
  %s0 = inlined_call_operand.hbm [shape: s32[2,8], index: 0, kind: input, shape index: {}, may-alias: {0,2}]
  %s1 = inlined_call_operand.hbm [shape: s32[2,8], index: 1, kind: input, shape index: {}]
  %s2 = inlined_call_operand.hbm [shape: s32[2,8], index: 2, kind: output, shape index: {}, may-alias: {0,2}]
  %s3 = sld [smem:[#allocation0]]
  $region26: #{mask_labels.1} parent=0
    _
  %s5 = ssub.s32 1, %s3
  %s6 = scalar_select 0, %s5, %s3
  $region1: #{mask_labels.1} parent=0
    #allocation2 [shape = 'u8[1024]{0}', space=vmem, size = 0x400, scoped, tag = 'input window, operand 0, single buffered']
    #allocation3 [shape = 's32[1]{0}', space=sflag, size = 0x4, scoped, tag = 'scoped memory for mask_labels.1']
    #allocation4 [shape = 's32[1]{0}', space=sflag, size = 0x4, scoped, tag = 'scoped memory for mask_labels.1']
    #allocation5 [shape = 'u8[1024]{0}', space=vmem, size = 0x400, scoped, tag = 'input window, operand 1, single buffered']
    #allocation6 [shape = 's32[1]{0}', space=sflag, size = 0x4, scoped, tag = 'scoped memory for mask_labels.1']
    #allocation7 [shape = 'u8[1024]{0}', space=vmem, size = 0x400, scoped, tag = 'output window, operand 0, single buffered']
    %7 = vsyncpa [#allocation3], 0
    %8 = vsyncpa [#allocation6], 0
    %9 = vsyncpa [#allocation4], 0
    // Predicated region
    $region2: #{mask_labels.1} parent=1 // pred_check
      _
    $region3: #{mask_labels.1} parent=1 // pred_check_branch
      %11 = sbr.rel (0) target = $region5
    $region4: #{mask_labels.1} parent=1 // pred_region
      %s13 = ssub.s32 32, 32
      %14 = vsyncadd [#allocation3], %s13
      %s16 = sshll.u32 [#allocation2], 4
      %s17 = int_to_ptr.vmem [resolvable:$true] %s16
      %19 = dma.hbm_to_vmem [thread:$0]  %s0, 32, %s17, [#allocation3]
    $region5: #{mask_labels.1} parent=1 // pred_fallthru
      _
    // Predicated region
    $region6: #{mask_labels.1} parent=1 // pred_check
      _
    $region7: #{mask_labels.1} parent=1 // pred_check_branch
      %21 = sbr.rel (0) target = $region9
    $region8: #{mask_labels.1} parent=1 // pred_region
      %s23 = ssub.s32 32, 32
      %24 = vsyncadd [#allocation6], %s23
      %s26 = sshll.u32 [#allocation5], 4
      %s27 = int_to_ptr.vmem [resolvable:$true] %s26
      %29 = dma.hbm_to_vmem [thread:$0]  %s1, 32, %s27, [#allocation6]
    $region9: #{mask_labels.1} parent=1 // pred_fallthru
      _
    // Predicated region
    $region10: #{mask_labels.1} parent=1 // pred_check
      _
    $region11: #{mask_labels.1} parent=1 // pred_check_branch
      %31 = sbr.rel (0) target = $region13
    $region12: #{mask_labels.1} parent=1 // pred_region
      %32 = dma.done [#allocation3], 32
    $region13: #{mask_labels.1} parent=1 // pred_fallthru
      _
    // Predicated region
    $region14: #{mask_labels.1} parent=1 // pred_check
      _
    $region15: #{mask_labels.1} parent=1 // pred_check_branch
      %34 = sbr.rel (0) target = $region17
    $region16: #{mask_labels.1} parent=1 // pred_region
      %35 = dma.done [#allocation6], 32
    $region17: #{mask_labels.1} parent=1 // pred_fallthru
      _
    %v36 = vld [vmem:[#allocation5] sm:$0x3]
    %vm37 = vcmp.eq.s32.totalorder %v36, 0
    %v38 = vld [vmem:[#allocation2] sm:$0x3]
    %v39 = vsel %vm37, 4294967196, %v38
    %vm40 = vcmask 58368
    %41 = vst.msk [vmem:[#allocation7] sm:$0x3] %vm40, %v39
    // Predicated region
    $region18: #{mask_labels.1} parent=1 // pred_check
      _
    $region19: #{mask_labels.1} parent=1 // pred_check_branch
      %43 = sbr.rel (0) target = $region21
    $region20: #{mask_labels.1} parent=1 // pred_region
      %s45 = ssub.s32 32, 32
      %46 = vsyncadd [#allocation4], %s45
      %s48 = sshll.u32 [#allocation7], 4
      %s49 = int_to_ptr.vmem [resolvable:$true] %s48
      %51 = dma.vmem_to_hbm [thread:$0]  %s49, 32, %s2, [#allocation4]
    $region21: #{mask_labels.1} parent=1 // pred_fallthru
      _
    // Predicated region
    $region22: #{mask_labels.1} parent=1 // pred_check
      _
    $region23: #{mask_labels.1} parent=1 // pred_check_branch
      %53 = sbr.rel (0) target = $region25
    $region24: #{mask_labels.1} parent=1 // pred_region
      %54 = dma.done [#allocation4], 32
    $region25: #{mask_labels.1} parent=1 // pred_fallthru
      _
    %55 = vsyncpa [#allocation3], 1
    %56 = vsyncpa [#allocation6], 1
    %57 = vsyncpa [#allocation4], 1

</llo_original>
